<compile_context>
chip_gen: v7x
topology: tpu7x:2x2x1
jax: 0.10.0
libtpu: 0.0.40
codegen_flags: <defaults>
</compile_context>

<pallas_src>
import functools

import jax
import jax.numpy as jnp
from jax.experimental import pallas as pl
from jax.experimental.pallas import tpu as pltpu

_LANES = 128


def _dice_sums_kernel(x_ref, t_ref, out_ref, acc_ref, *, use_sigmoid: bool):
    """Per-(batch, spatial-tile) partial reduction.

    x_ref, t_ref : (1, C, TR, 128) VMEM blocks (one batch element, one spatial tile).
    out_ref      : (1, 3, 128) VMEM block of per-batch partial sums
                   [0]=sum(p*t), [1]=sum(p), [2]=sum(t); written once per batch.
    acc_ref      : (3, TR, 128) f32 VMEM scratch, resident across the grid.
    """
    s = pl.program_id(1)
    ns = pl.num_programs(1)

    @pl.when(s == 0)
    def _init():
        acc_ref[...] = jnp.zeros_like(acc_ref)

    x = x_ref[0].astype(jnp.float32)  # (C, TR, 128)
    t = t_ref[0].astype(jnp.float32)  # (C, TR, 128)

    if use_sigmoid:
        p = jax.nn.sigmoid(x)
    else:
        # Softmax over the channel axis. C is a leading (non-vreg) dim, so the
        # reductions over axis 0 are elementwise VPU ops across (TR,128) vregs.
        m = jnp.max(x, axis=0, keepdims=True)
        e = jnp.exp(x - m)
        p = e / jnp.sum(e, axis=0, keepdims=True)

    # Channel reductions stay on the VPU; accumulate into a lane-dense slab.
    acc_ref[0] += jnp.sum(p * t, axis=0)  # (TR, 128)
    acc_ref[1] += jnp.sum(p, axis=0)
    acc_ref[2] += jnp.sum(t, axis=0)

    @pl.when(s == ns - 1)
    def _finalize():
        # Single cross-sublane reduce per batch element; lanes stay dense.
        out_ref[0] = jnp.sum(acc_ref[...], axis=1)  # (3, 128)


def dice_sensitivity_loss(inputs, targets, n_classes, smooth=1.0):
    """Pallas TPU implementation of DiceSensitivityLoss.forward."""
    B, C, H, W = inputs.shape
    S = H * W
    use_sigmoid = (n_classes == 1)

    S_rows = -(-S // _LANES)
    # Spatial rows per tile: keep each (C, TR, 128) f32 intermediate ~<= 2 MiB
    # so double-buffered inputs + intermediates stay well inside scoped VMEM
    # on all of v5e/v6e/v7x.
    tr_max = min(256, max(8, (4096 // max(C, 1)) // 8 * 8))
    if S_rows <= tr_max:
        TR = S_rows
        n_s_tiles = 1
    else:
        TR = tr_max
        n_s_tiles = -(-S_rows // TR)
    S_rows_pad = n_s_tiles * TR
    S_pad = S_rows_pad * _LANES
    pad = S_pad - S

    x = inputs.reshape(B, C, S)
    t = targets.reshape(B, C, S)

    pad_correction = 0.0
    if pad > 0:
        if use_sigmoid:
            x_pad_val = -1e30  # sigmoid(pad) == 0 -> no correction needed
        else:
            x_pad_val = 0.0    # softmax of equal logits sums to exactly 1/location
            pad_correction = float(B * pad)
        x = jnp.pad(x, ((0, 0), (0, 0), (0, pad)), constant_values=x_pad_val)
        t = jnp.pad(t, ((0, 0), (0, 0), (0, pad)))

    # Stream in native dtype; cast per tile inside the kernel.
    x = x.reshape(B, C, S_rows_pad, _LANES)
    t = t.reshape(B, C, S_rows_pad, _LANES)

    kernel = functools.partial(_dice_sums_kernel, use_sigmoid=use_sigmoid)

    per_batch = pl.pallas_call(
        kernel,
        out_shape=jax.ShapeDtypeStruct((B, 3, _LANES), jnp.float32),
        grid_spec=pltpu.PrefetchScalarGridSpec(
            num_scalar_prefetch=0,
            grid=(B, n_s_tiles),
            in_specs=[
                pl.BlockSpec((1, C, TR, _LANES), lambda b, s: (b, 0, s, 0)),
                pl.BlockSpec((1, C, TR, _LANES), lambda b, s: (b, 0, s, 0)),
            ],
            out_specs=pl.BlockSpec((1, 3, _LANES), lambda b, s: (b, 0, 0)),
            scratch_shapes=[pltpu.VMEM((3, TR, _LANES), jnp.float32)],
        ),
        compiler_params=pltpu.CompilerParams(
            dimension_semantics=("parallel", "arbitrary"),
        ),
    )(x, t)

    totals = jnp.sum(per_batch, axis=(0, 2))  # (3,)
    intersection = totals[0]
    p_sum = totals[1] - pad_correction
    t_sum = totals[2]
    dice = (2.0 * intersection + smooth) / (t_sum + p_sum + smooth)
    return 2.0 - dice


def _reference(inputs, targets, n_classes, smooth=1.0):
    if n_classes == 1:
        p = jax.nn.sigmoid(inputs)
    else:
        p = jax.nn.softmax(inputs, axis=1)
    y_true_f = p.reshape(-1)
    y_pred_f = targets.reshape(-1)
    inter = jnp.sum(y_true_f * y_pred_f)
    dice = (2.0 * inter + smooth) / (jnp.sum(y_pred_f) + jnp.sum(y_true_f) + smooth)
    return 2.0 - dice


if __name__ == "__main__":
    key = jax.random.PRNGKey(0)
    k1, k2, k3, k4, k5, k6 = jax.random.split(key, 6)

    # --- multi-class (softmax) path: B=2, C=4, H=W=16 ---
    B, C, H, W = 2, 4, 16, 16
    inputs = jax.random.normal(k1, (B, C, H, W), dtype=jnp.float32)
    labels = jax.random.randint(k2, (B, H, W), 0, C)
    targets = jax.nn.one_hot(labels, C, dtype=jnp.float32).transpose(0, 3, 1, 2)
    loss = jax.block_until_ready(dice_sensitivity_loss(inputs, targets, C))
    ref = _reference(inputs, targets, C)
    assert jnp.allclose(loss, ref, rtol=1e-5, atol=1e-5), (loss, ref)

    # --- binary (sigmoid) path: B=2, C=1, H=W=16 ---
    x1 = jax.random.normal(k3, (2, 1, 16, 16), dtype=jnp.float32)
    t1 = (jax.random.uniform(k4, (2, 1, 16, 16)) > 0.5).astype(jnp.float32)
    loss1 = jax.block_until_ready(dice_sensitivity_loss(x1, t1, 1))
    ref1 = _reference(x1, t1, 1)
    assert jnp.allclose(loss1, ref1, rtol=1e-5, atol=1e-5), (loss1, ref1)

    # --- spatial size not a multiple of 128 (exercises pad correction) ---
    x2 = jax.random.normal(k5, (2, 4, 10, 10), dtype=jnp.float32)
    l2 = jax.random.randint(k6, (2, 10, 10), 0, 4)
    t2 = jax.nn.one_hot(l2, 4, dtype=jnp.float32).transpose(0, 3, 1, 2)
    loss2 = jax.block_until_ready(dice_sensitivity_loss(x2, t2, 4))
    ref2 = _reference(x2, t2, 4)
    assert jnp.allclose(loss2, ref2, rtol=1e-5, atol=1e-5), (loss2, ref2)

    print("KERNEL_OK")
</pallas_src>

<mosaic_0001>
module attributes {stable_mosaic.version = 11 : i64} {
  func.func @_dice_sums_kernel(%arg0: i32, %arg1: i32, %arg2: memref<1x4x2x128xf32, #tpu.memory_space<vmem>>, %arg3: memref<1x4x2x128xf32, #tpu.memory_space<vmem>>, %arg4: memref<1x3x128xf32, #tpu.memory_space<vmem>>, %arg5: memref<3x2x128xf32, #tpu.memory_space<vmem>>) attributes {dimension_semantics = [#tpu.dimension_semantics<parallel>, #tpu.dimension_semantics<arbitrary>], iteration_bounds = array<i64: 2, 1>, scalar_prefetch = 0 : i64, scratch_operands = 1 : i64, tpu.core_type = #tpu.core_type<tc>, window_params = [{transform_indices = @transform_0, window_bounds = array<i64: 1, 4, 2, 128>}, {transform_indices = @transform_1, window_bounds = array<i64: 1, 4, 2, 128>}, {transform_indices = @transform_2, window_bounds = array<i64: 1, 3, 128>}]} {
    %c0_i32 = arith.constant 0 : i32
    %0 = arith.cmpi eq, %arg1, %c0_i32 : i32
    %1 = arith.extui %0 : i1 to i32
    %c0_i32_0 = arith.constant 0 : i32
    %2 = arith.cmpi ne, %1, %c0_i32_0 : i32
    scf.if %2 {
      %cst_30 = arith.constant 0.000000e+00 : f32
      %41 = vector.broadcast %cst_30 : f32 to vector<3x2x128xf32>
      %c0_31 = arith.constant 0 : index
      %c0_32 = arith.constant 0 : index
      %c0_33 = arith.constant 0 : index
      %42 = vector.load %arg5[%c0_31, %c0_32, %c0_33] : memref<3x2x128xf32, #tpu.memory_space<vmem>>, vector<3x2x128xf32>
      tpu.vector_store %arg5[%c0_31, %c0_32, %c0_33], %41 {strides = array<i32>} : memref<3x2x128xf32, #tpu.memory_space<vmem>>, vector<3x2x128xf32>,
    } else {
    }
    %c0 = arith.constant 0 : index
    %c0_1 = arith.constant 0 : index
    %c0_2 = arith.constant 0 : index
    %c0_3 = arith.constant 0 : index
    %3 = vector.load %arg2[%c0, %c0_1, %c0_2, %c0_3] : memref<1x4x2x128xf32, #tpu.memory_space<vmem>>, vector<1x4x2x128xf32>
    %4 = vector.shape_cast %3 : vector<1x4x2x128xf32> to vector<4x2x128xf32>
    %c0_4 = arith.constant 0 : index
    %c0_5 = arith.constant 0 : index
    %c0_6 = arith.constant 0 : index
    %c0_7 = arith.constant 0 : index
    %5 = vector.load %arg3[%c0_4, %c0_5, %c0_6, %c0_7] : memref<1x4x2x128xf32, #tpu.memory_space<vmem>>, vector<1x4x2x128xf32>
    %6 = vector.shape_cast %5 : vector<1x4x2x128xf32> to vector<4x2x128xf32>
    %cst = arith.constant dense<0xFF800000> : vector<2x128xf32>
    %7 = vector.multi_reduction <maximumf>, %4, %cst [0] : vector<4x2x128xf32> to vector<2x128xf32>
    %8 = vector.shape_cast %7 : vector<2x128xf32> to vector<1x2x128xf32>
    %9 = vector.broadcast %8 : vector<1x2x128xf32> to vector<4x2x128xf32>
    %10 = arith.subf %4, %9 : vector<4x2x128xf32>
    %11 = math.exp %10 : vector<4x2x128xf32>
    %cst_8 = arith.constant dense<0.000000e+00> : vector<2x128xf32>
    %12 = vector.multi_reduction <add>, %11, %cst_8 [0] : vector<4x2x128xf32> to vector<2x128xf32>
    %13 = vector.shape_cast %12 : vector<2x128xf32> to vector<1x2x128xf32>
    %14 = vector.broadcast %13 : vector<1x2x128xf32> to vector<4x2x128xf32>
    %15 = arith.divf %11, %14 : vector<4x2x128xf32>
    %c0_9 = arith.constant 0 : index
    %c0_10 = arith.constant 0 : index
    %c0_11 = arith.constant 0 : index
    %16 = vector.load %arg5[%c0_9, %c0_10, %c0_11] : memref<3x2x128xf32, #tpu.memory_space<vmem>>, vector<1x2x128xf32>
    %17 = vector.shape_cast %16 : vector<1x2x128xf32> to vector<2x128xf32>
    %18 = arith.mulf %15, %6 : vector<4x2x128xf32>
    %cst_12 = arith.constant dense<0.000000e+00> : vector<2x128xf32>
    %19 = vector.multi_reduction <add>, %18, %cst_12 [0] : vector<4x2x128xf32> to vector<2x128xf32>
    %20 = arith.addf %17, %19 : vector<2x128xf32>
    %c0_13 = arith.constant 0 : index
    %c0_14 = arith.constant 0 : index
    %c0_15 = arith.constant 0 : index
    %21 = vector.load %arg5[%c0_13, %c0_14, %c0_15] : memref<3x2x128xf32, #tpu.memory_space<vmem>>, vector<1x2x128xf32>
    %22 = vector.shape_cast %21 : vector<1x2x128xf32> to vector<2x128xf32>
    %23 = vector.shape_cast %20 : vector<2x128xf32> to vector<1x2x128xf32>
    tpu.vector_store %arg5[%c0_13, %c0_14, %c0_15], %23 {strides = array<i32>} : memref<3x2x128xf32, #tpu.memory_space<vmem>>, vector<1x2x128xf32>,
    %c1 = arith.constant 1 : index
    %c0_16 = arith.constant 0 : index
    %c0_17 = arith.constant 0 : index
    %24 = vector.load %arg5[%c1, %c0_16, %c0_17] : memref<3x2x128xf32, #tpu.memory_space<vmem>>, vector<1x2x128xf32>
    %25 = vector.shape_cast %24 : vector<1x2x128xf32> to vector<2x128xf32>
    %cst_18 = arith.constant dense<0.000000e+00> : vector<2x128xf32>
    %26 = vector.multi_reduction <add>, %15, %cst_18 [0] : vector<4x2x128xf32> to vector<2x128xf32>
    %27 = arith.addf %25, %26 : vector<2x128xf32>
    %c1_19 = arith.constant 1 : index
    %c0_20 = arith.constant 0 : index
    %c0_21 = arith.constant 0 : index
    %28 = vector.load %arg5[%c1_19, %c0_20, %c0_21] : memref<3x2x128xf32, #tpu.memory_space<vmem>>, vector<1x2x128xf32>
    %29 = vector.shape_cast %28 : vector<1x2x128xf32> to vector<2x128xf32>
    %30 = vector.shape_cast %27 : vector<2x128xf32> to vector<1x2x128xf32>
    tpu.vector_store %arg5[%c1_19, %c0_20, %c0_21], %30 {strides = array<i32>} : memref<3x2x128xf32, #tpu.memory_space<vmem>>, vector<1x2x128xf32>,
    %c2 = arith.constant 2 : index
    %c0_22 = arith.constant 0 : index
    %c0_23 = arith.constant 0 : index
    %31 = vector.load %arg5[%c2, %c0_22, %c0_23] : memref<3x2x128xf32, #tpu.memory_space<vmem>>, vector<1x2x128xf32>
    %32 = vector.shape_cast %31 : vector<1x2x128xf32> to vector<2x128xf32>
    %cst_24 = arith.constant dense<0.000000e+00> : vector<2x128xf32>
    %33 = vector.multi_reduction <add>, %6, %cst_24 [0] : vector<4x2x128xf32> to vector<2x128xf32>
    %34 = arith.addf %32, %33 : vector<2x128xf32>
    %c2_25 = arith.constant 2 : index
    %c0_26 = arith.constant 0 : index
    %c0_27 = arith.constant 0 : index
    %35 = vector.load %arg5[%c2_25, %c0_26, %c0_27] : memref<3x2x128xf32, #tpu.memory_space<vmem>>, vector<1x2x128xf32>
    %36 = vector.shape_cast %35 : vector<1x2x128xf32> to vector<2x128xf32>
    %37 = vector.shape_cast %34 : vector<2x128xf32> to vector<1x2x128xf32>
    tpu.vector_store %arg5[%c2_25, %c0_26, %c0_27], %37 {strides = array<i32>} : memref<3x2x128xf32, #tpu.memory_space<vmem>>, vector<1x2x128xf32>,
    %c0_i32_28 = arith.constant 0 : i32
    %38 = arith.cmpi eq, %arg1, %c0_i32_28 : i32
    %39 = arith.extui %38 : i1 to i32
    %c0_i32_29 = arith.constant 0 : i32
    %40 = arith.cmpi ne, %39, %c0_i32_29 : i32
    scf.if %40 {
      %c0_30 = arith.constant 0 : index
      %c0_31 = arith.constant 0 : index
      %c0_32 = arith.constant 0 : index
      %41 = vector.load %arg5[%c0_30, %c0_31, %c0_32] : memref<3x2x128xf32, #tpu.memory_space<vmem>>, vector<3x2x128xf32>
      %cst_33 = arith.constant dense<0.000000e+00> : vector<3x128xf32>
      %42 = vector.multi_reduction <add>, %41, %cst_33 [1] : vector<3x2x128xf32> to vector<3x128xf32>
      %c0_34 = arith.constant 0 : index
      %c0_35 = arith.constant 0 : index
      %c0_36 = arith.constant 0 : index
      %43 = vector.load %arg4[%c0_34, %c0_35, %c0_36] : memref<1x3x128xf32, #tpu.memory_space<vmem>>, vector<1x3x128xf32>
      %44 = vector.shape_cast %43 : vector<1x3x128xf32> to vector<3x128xf32>
      %45 = vector.shape_cast %42 : vector<3x128xf32> to vector<1x3x128xf32>
      tpu.vector_store %arg4[%c0_34, %c0_35, %c0_36], %45 {strides = array<i32>} : memref<1x3x128xf32, #tpu.memory_space<vmem>>, vector<1x3x128xf32>,
    } else {
    }
    return
  }
  func.func @transform_0(%arg0: i32, %arg1: i32) -> (i32, i32, i32, i32) {
    %c0_i32 = arith.constant 0 : i32
    %c0_i32_0 = arith.constant 0 : i32
    %c0_i32_1 = arith.constant 0 : i32
    return %arg0, %c0_i32, %arg1, %c0_i32_0 : i32, i32, i32, i32
  }
  func.func @transform_1(%arg0: i32, %arg1: i32) -> (i32, i32, i32, i32) {
    %c0_i32 = arith.constant 0 : i32
    %c0_i32_0 = arith.constant 0 : i32
    %c0_i32_1 = arith.constant 0 : i32
    return %arg0, %c0_i32, %arg1, %c0_i32_0 : i32, i32, i32, i32
  }
  func.func @transform_2(%arg0: i32, %arg1: i32) -> (i32, i32, i32) {
    %c0_i32 = arith.constant 0 : i32
    %c0_i32_0 = arith.constant 0 : i32
    %c0_i32_1 = arith.constant 0 : i32
    return %arg0, %c0_i32, %c0_i32_0 : i32, i32, i32
  }
}

</mosaic_0001>

<llo_original>
// kernel: tpu_custom_call.1
$region0: #{tpu_custom_call.1}
  #allocation0 [shape = 'u32[]', space=smem, size = 0x4, offset = 0x4, fixed_abs, tag = 'smem constant byte address 0x4 - core index']
  #allocation1 [shape = 'u32[144,128]{1,0:T(1,128)}', space=vmem, size = 0x12000, scoped, tag = 'internal scratch']
  #allocation2 [shape = 'f32[3,2,128]{2,1,0:T(2,128)}', space=vmem, size = 0xc00, scoped, tag = 'scratch operand']
  %s0 = inlined_call_operand.hbm [shape: f32[2,4,2,128], index: 0, kind: input, shape index: {}]
  %s1 = inlined_call_operand.hbm [shape: f32[2,4,2,128], index: 1, kind: input, shape index: {}]
  %s2 = inlined_call_operand.vmem [shape: f32[2,3,128], index: 2, kind: output, shape index: {}]
  %s3 = sld [smem:[#allocation0]]
  $region57: #{tpu_custom_call.1} parent=0
    _
  %s5 = ssub.s32 1, %s3
  %s6 = scalar_select 0, %s5, %s3
  $region1: #{tpu_custom_call.1} parent=0
    #allocation3 [shape = 'u8[8192]{0}', space=vmem, size = 0x2000, scoped, tag = 'input window, operand 0']
    #allocation4 [shape = 's32[2]{0}', space=sflag, size = 0x8, scoped, tag = 'scoped memory for tpu_custom_call.1']
    #allocation5 [shape = 'u8[8192]{0}', space=vmem, size = 0x2000, scoped, tag = 'input window, operand 1']
    #allocation6 [shape = 's32[2]{0}', space=sflag, size = 0x8, scoped, tag = 'scoped memory for tpu_custom_call.1']
    %7 = vsyncpa [#allocation4], 0
    %s8 = scalar_lea.sflag [#allocation4], 1
    %9 = vsyncpa %s8, 0
    %10 = vsyncpa [#allocation6], 0
    %s11 = scalar_lea.sflag [#allocation6], 1
    %12 = vsyncpa %s11, 0
    loop: start=0, step=1, limit=4
    $region2: #{tpu_custom_call.1} parent=1 // loop_pre_header
      _
    $region3: #{tpu_custom_call.1} parent=1 // loop_header
      %s14 = sphi 0, %s18
      %p15 = scmp.ge.s32.totalorder %s14, 4
      %s21 = sphi 0, %s33
      %s22 = sphi 0, %s29
      %s23 = sphi 0, %s21
      %s24 = sphi 0, %s22
      %s25 = sphi 0, %s23
      %s26 = sphi 0, %s24
      %s38 = sphi 0, %s40
      %s41 = sphi 0, %s38
      %s42 = sphi 0, %s41
      %s58 = sphi 0, %s42
      %s66 = sphi 0, %s68
      %s69 = sphi 0, %s66
      %s70 = sphi 0, %s69
      %s86 = sphi 0, %s70
      %s92 = sphi 0, %s94
      %s95 = sphi 0, %s92
      %s96 = sphi 0, %s95
      %s112 = sphi 0, %s96
    $region4: #{tpu_custom_call.1} parent=1 // loop_header_branch
      %17 = sbr.rel (%p15) target = $region8
    $region5: #{tpu_custom_call.1} parent=1 // loop_body
      %s19 = ssub.s32 %s14, 1
      %s20 = ssub.s32 %s14, 2
      %s27 = sadd.s32 1, %s22
      %p28 = scmp.ge.s32.totalorder %s27, 1
      %s29 = scalar_select %p28, 0, %s27
      %s30 = sadd.s32 1, %s21
      %s31 = scalar_select %p28, %s30, %s21
      %p32 = scmp.ge.s32.totalorder %s31, 2
      %s33 = scalar_select %p32, 0, %s31
      %s34 = ssub.s32 %s21, %s33
      %s35 = ssub.s32 %s22, %s29
      %s36 = sor.u32 %s34, %s35
      %p37 = scmp.eq.s32.totalorder %s36, 0
      %s39 = sadd.s32 %s38, 1
      %s40 = scalar_select %p37, %s38, %s39
      %p43 = pneg %p37
      %p44 = scmp.eq.s32.totalorder %s14, 1
      %p45 = por %p43, %p44
      %p46 = scmp.ne.s32.totalorder %s38, %s41
      %p47 = scmp.eq.s32.totalorder %s14, 0
      %p48 = por %p46, %p47
      %p49 = scmp.ne.s32.totalorder %s38, %s41
      %p50 = scmp.eq.s32.totalorder %s19, 1
      %p51 = por %p49, %p50
      %p52 = scmp.ne.s32.totalorder %s41, %s42
      %p53 = scmp.eq.s32.totalorder %s19, 0
      %p54 = por %p52, %p53
      %p55 = scmp.ne.s32.totalorder %s41, %s42
      %p56 = scmp.eq.s32.totalorder %s20, 1
      %p57 = por %p55, %p56
      %p59 = scmp.ne.s32.totalorder %s42, %s58
      %p60 = scmp.eq.s32.totalorder %s20, 0
      %p61 = por %p59, %p60
      %s62 = ssub.s32 %s21, %s33
      %s63 = ssub.s32 %s22, %s29
      %s64 = sor.u32 %s62, %s63
      %p65 = scmp.eq.s32.totalorder %s64, 0
      %s67 = sadd.s32 %s66, 1
      %s68 = scalar_select %p65, %s66, %s67
      %p71 = pneg %p65
      %p72 = scmp.eq.s32.totalorder %s14, 1
      %p73 = por %p71, %p72
      %p74 = scmp.ne.s32.totalorder %s66, %s69
      %p75 = scmp.eq.s32.totalorder %s14, 0
      %p76 = por %p74, %p75
      %p77 = scmp.ne.s32.totalorder %s66, %s69
      %p78 = scmp.eq.s32.totalorder %s19, 1
      %p79 = por %p77, %p78
      %p80 = scmp.ne.s32.totalorder %s69, %s70
      %p81 = scmp.eq.s32.totalorder %s19, 0
      %p82 = por %p80, %p81
      %p83 = scmp.ne.s32.totalorder %s69, %s70
      %p84 = scmp.eq.s32.totalorder %s20, 1
      %p85 = por %p83, %p84
      %p87 = scmp.ne.s32.totalorder %s70, %s86
      %p88 = scmp.eq.s32.totalorder %s20, 0
      %p89 = por %p87, %p88
      %s90 = ssub.s32 %s21, %s33
      %p91 = scmp.eq.s32.totalorder %s90, 0
      %s93 = sadd.s32 %s92, 1
      %s94 = scalar_select %p91, %s92, %s93
      %p97 = pneg %p91
      %p98 = scmp.eq.s32.totalorder %s14, 1
      %p99 = por %p97, %p98
      %p100 = scmp.ne.s32.totalorder %s92, %s95
      %p101 = scmp.eq.s32.totalorder %s14, 0
      %p102 = por %p100, %p101
      %p103 = scmp.ne.s32.totalorder %s92, %s95
      %p104 = scmp.eq.s32.totalorder %s19, 1
      %p105 = por %p103, %p104
      %p106 = scmp.ne.s32.totalorder %s95, %s96
      %p107 = scmp.eq.s32.totalorder %s19, 0
      %p108 = por %p106, %p107
      %p109 = scmp.ne.s32.totalorder %s95, %s96
      %p110 = scmp.eq.s32.totalorder %s20, 1
      %p111 = por %p109, %p110
      %p113 = scmp.ne.s32.totalorder %s96, %s112
      %p114 = scmp.eq.s32.totalorder %s20, 0
      %p115 = por %p113, %p114
      %p116 = scmp.le.s32.totalorder 1, %s14
      %p117 = scmp.lt.s32.totalorder %s14, 3
      %p118 = pnand %p116, %p117
      %p119 = pneg %p118
      // Predicated region
      $region9: #{tpu_custom_call.1} parent=5 // pred_check
        _
      $region10: #{tpu_custom_call.1} parent=5 // pred_check_branch
        %121 = sbr.rel (%p118) target = $region12
      $region11: #{tpu_custom_call.1} parent=5 // pred_region
        %s122 = ssub.s32 %s14, 1
      $region12: #{tpu_custom_call.1} parent=5 // pred_fallthru
        _
      %p123 = scmp.lt.s32.totalorder %s14, 2
      // Predicated region
      $region13: #{tpu_custom_call.1} parent=5 // pred_check
        %p124 = pneg %p123
      $region14: #{tpu_custom_call.1} parent=5 // pred_check_branch
        %126 = sbr.rel (%p124) target = $region16
      $region15: #{tpu_custom_call.1} parent=5 // pred_region
        // Predicated region
        $region17: #{tpu_custom_call.1} parent=15 // pred_check
          %p127 = pneg %p48
        $region18: #{tpu_custom_call.1} parent=15 // pred_check_branch
          %129 = sbr.rel (%p127) target = $region20
        $region19: #{tpu_custom_call.1} parent=15 // pred_region
          %s130 = sand.u32 %s38, 1
          %s131 = scalar_lea.sflag [#allocation4], %s130
          %s132 = sand.u32 %s38, 1
          %s133 = smul.addr %s132, 8
          %s134 = scalar_lea.vmem [#allocation3], %s133
          %s136 = ssub.s32 128, 128
          %137 = vsyncadd %s131, %s136
          %s138 = smul.addr %s21, 4
          %s139 = sadd.s32 %s22, %s138
          %s140 = smul.addr %s139, 32
          %s141 = scalar_lea.hbm %s0, %s140
          %s142 = sshll.u32 %s134, 4
          %s143 = int_to_ptr.vmem [resolvable:$true] %s142
          %148 = dma.hbm_to_vmem [thread:$0]  %s141, 128, %s143, %s131, 32, 32, 2
        $region20: #{tpu_custom_call.1} parent=15 // pred_fallthru
          _
        // Predicated region
        $region21: #{tpu_custom_call.1} parent=15 // pred_check
          %p149 = pneg %p76
        $region22: #{tpu_custom_call.1} parent=15 // pred_check_branch
          %151 = sbr.rel (%p149) target = $region24
        $region23: #{tpu_custom_call.1} parent=15 // pred_region
          %s152 = sand.u32 %s66, 1
          %s153 = scalar_lea.sflag [#allocation6], %s152
          %s154 = sand.u32 %s66, 1
          %s155 = smul.addr %s154, 8
          %s156 = scalar_lea.vmem [#allocation5], %s155
          %s158 = ssub.s32 128, 128
          %159 = vsyncadd %s153, %s158
          %s160 = smul.addr %s21, 4
          %s161 = sadd.s32 %s22, %s160
          %s162 = smul.addr %s161, 32
          %s163 = scalar_lea.hbm %s1, %s162
          %s164 = sshll.u32 %s156, 4
          %s165 = int_to_ptr.vmem [resolvable:$true] %s164
          %170 = dma.hbm_to_vmem [thread:$0]  %s163, 128, %s165, %s153, 32, 32, 2
        $region24: #{tpu_custom_call.1} parent=15 // pred_fallthru
          _
      $region16: #{tpu_custom_call.1} parent=5 // pred_fallthru
        _
      %p171 = scmp.le.s32.totalorder 1, %s14
      %p172 = scmp.lt.s32.totalorder %s14, 3
      %p173 = pnand %p171, %p172
      %p174 = pneg %p173
      // Predicated region
      $region25: #{tpu_custom_call.1} parent=5 // pred_check
        _
      $region26: #{tpu_custom_call.1} parent=5 // pred_check_branch
        %176 = sbr.rel (%p173) target = $region28
      $region27: #{tpu_custom_call.1} parent=5 // pred_region
        %s177 = ssub.s32 %s14, 1
        %s178 = sand.u32 %s41, 1
        %s179 = scalar_lea.sflag [#allocation4], %s178
        %s180 = sand.u32 %s41, 1
        %s181 = smul.addr %s180, 8
        %s182 = scalar_lea.vmem [#allocation3], %s181
        // Predicated region
        $region29: #{tpu_custom_call.1} parent=27 // pred_check
          %p183 = pneg %p54
        $region30: #{tpu_custom_call.1} parent=27 // pred_check_branch
          %185 = sbr.rel (%p183) target = $region32
        $region31: #{tpu_custom_call.1} parent=27 // pred_region
          %186 = dma.done %s179, 128
        $region32: #{tpu_custom_call.1} parent=27 // pred_fallthru
          _
        %s187 = sand.u32 %s69, 1
        %s188 = scalar_lea.sflag [#allocation6], %s187
        %s189 = sand.u32 %s69, 1
        %s190 = smul.addr %s189, 8
        %s191 = scalar_lea.vmem [#allocation5], %s190
        // Predicated region
        $region33: #{tpu_custom_call.1} parent=27 // pred_check
          %p192 = pneg %p82
        $region34: #{tpu_custom_call.1} parent=27 // pred_check_branch
          %194 = sbr.rel (%p192) target = $region36
        $region35: #{tpu_custom_call.1} parent=27 // pred_region
          %195 = dma.done %s188, 128
        $region36: #{tpu_custom_call.1} parent=27 // pred_fallthru
          _
        %s196 = sand.u32 %s41, 1
        %s197 = scalar_lea.sflag [#allocation4], %s196
        %s198 = sand.u32 %s41, 1
        %s199 = smul.addr %s198, 8
        %s200 = scalar_lea.vmem [#allocation3], %s199
        %p201 = pneg %p54
        %p202 = pneg %p51
        %s203 = sand.u32 %s69, 1
        %s204 = scalar_lea.sflag [#allocation6], %s203
        %s205 = sand.u32 %s69, 1
        %s206 = smul.addr %s205, 8
        %s207 = scalar_lea.vmem [#allocation5], %s206
        %p208 = pneg %p82
        %p209 = pneg %p79
        %p210 = pneg %p108
        %p211 = pneg %p105
        %p212 = scmp.lt.s32.totalorder %s23, 1
        %s213 = scalar_select %p212, %s23, 1
        %s214 = smul.addr %s213, 4
        %s215 = scalar_lea.vmem %s2, %s214
        %p216 = scmp.lt.s32.totalorder %s23, 1
        %s217 = scalar_select %p216, %s23, 1
        %s218 = smul.addr %s217, 4
        %s219 = scalar_lea.vmem %s2, %s218
        %p220 = scmp.eq.s32.totalorder %s24, 0
        // Predicated region
        $region37: #{tpu_custom_call.1} parent=27 // pred_check
          %p221 = pneg %p220
        $region38: #{tpu_custom_call.1} parent=27 // pred_check_branch
          %223 = sbr.rel (%p221) target = $region40
        $region39: #{tpu_custom_call.1} parent=27 // pred_region
          %224 = vst [vmem:[#allocation2] sm:$0x3] 0.0
          %225 = vst [vmem:[#allocation2 + $0x2] sm:$0x3] 0.0
          %226 = vst [vmem:[#allocation2 + $0x4] sm:$0x3] 0.0
        $region40: #{tpu_custom_call.1} parent=27 // pred_fallthru
          _
        %v227 = vld [vmem:[%s182] sm:$0x3]
        %v228 = vld [vmem:[%s182 + $0x2] sm:$0x3]
        %v229 = vld [vmem:[%s182 + $0x4] sm:$0x3]
        %v230 = vld [vmem:[%s182 + $0x6] sm:$0x3]
        %v231 = vld [vmem:[%s191] sm:$0x3]
        %v232 = vld [vmem:[%s191 + $0x2] sm:$0x3]
        %v233 = vld [vmem:[%s191 + $0x4] sm:$0x3]
        %v234 = vld [vmem:[%s191 + $0x6] sm:$0x3]
        %vm235 = vcmask 1041408
        %v236 = vsel %vm235, %v227, -inf
        %v237 = vsel %vm235, %v228, -inf
        %v238 = vsel %vm235, %v229, -inf
        %v239 = vsel %vm235, %v230, -inf
        %v240 = vmax.f32 %v236, %v237
        %v241 = vmax.f32 %v238, %v239
        %v242 = vmax.f32 %v240, %v241
        %v243 = vsub.f32 %v227, %v242
        %v244 = vsub.f32 %v228, %v242
        %v245 = vsub.f32 %v229, %v242
        %v246 = vsub.f32 %v230, %v242
        %v247 = vmul.f32 %v243, 1.442695
        %v248 = vpow.pop %v247
        %v249 = vmul.f32 %v244, 1.442695
        %v250 = vpow.pop %v249
        %v251 = vmul.f32 %v245, 1.442695
        %v252 = vpow.pop %v251
        %v253 = vmul.f32 %v246, 1.442695
        %v254 = vpow.pop %v253
        %v255 = vsel %vm235, %v248, 0.0
        %v256 = vsel %vm235, %v250, 0.0
        %v257 = vadd.f32 %v255, %v256
        %v258 = vsel %vm235, %v252, 0.0
        %v259 = vadd.f32 %v257, %v258
        %v260 = vsel %vm235, %v254, 0.0
        %v261 = vadd.f32 %v259, %v260
        %v262 = vrcp.pop %v261
        %v263 = vmul.f32 %v248, %v262
        %v264 = vmul.f32 %v250, %v262
        %v265 = vmul.f32 %v252, %v262
        %v266 = vmul.f32 %v254, %v262
        %v267 = vld [vmem:[#allocation2] sm:$0x3]
        %v268 = vmul.f32 %v263, %v231
        %v269 = vmul.f32 %v264, %v232
        %v270 = vmul.f32 %v265, %v233
        %v271 = vmul.f32 %v266, %v234
        %v272 = vsel %vm235, %v268, 0.0
        %v273 = vsel %vm235, %v269, 0.0
        %v274 = vadd.f32 %v272, %v273
        %v275 = vsel %vm235, %v270, 0.0
        %v276 = vadd.f32 %v274, %v275
        %v277 = vsel %vm235, %v271, 0.0
        %v278 = vadd.f32 %v276, %v277
        %v279 = vadd.f32 %v267, %v278
        %280 = vst [vmem:[#allocation2] sm:$0x3] %v279
        %s281 = scalar_lea.vmem [#allocation2], 2
        %v282 = vld [vmem:[%s281] sm:$0x3]
        %v283 = vsel %vm235, %v263, 0.0
        %v284 = vsel %vm235, %v264, 0.0
        %v285 = vadd.f32 %v283, %v284
        %v286 = vsel %vm235, %v265, 0.0
        %v287 = vadd.f32 %v285, %v286
        %v288 = vsel %vm235, %v266, 0.0
        %v289 = vadd.f32 %v287, %v288
        %v290 = vadd.f32 %v282, %v289
        %291 = vst [vmem:[%s281] sm:$0x3] %v290
        %s292 = scalar_lea.vmem [#allocation2], 4
        %v293 = vld [vmem:[%s292] sm:$0x3]
        %v294 = vsel %vm235, %v231, 0.0
        %v295 = vsel %vm235, %v232, 0.0
        %v296 = vadd.f32 %v294, %v295
        %v297 = vsel %vm235, %v233, 0.0
        %v298 = vadd.f32 %v296, %v297
        %v299 = vsel %vm235, %v234, 0.0
        %v300 = vadd.f32 %v298, %v299
        %v301 = vadd.f32 %v293, %v300
        %302 = vst [vmem:[%s292] sm:$0x3] %v301
        // Predicated region
        $region41: #{tpu_custom_call.1} parent=27 // pred_check
          %p303 = pneg %p220
        $region42: #{tpu_custom_call.1} parent=27 // pred_check_branch
          %305 = sbr.rel (%p303) target = $region44
        $region43: #{tpu_custom_call.1} parent=27 // pred_region
          %v306 = vld [vmem:[#allocation2] sm:$0x3]
          %v307 = vld [vmem:[#allocation2 + $0x2] sm:$0x3]
          %v308 = vld [vmem:[#allocation2 + $0x4] sm:$0x3]
          %v309 = vsel %vm235, %v306, 0.0
          %v310 = vrot.slane %v309, 4
          %v311 = vadd.f32 %v309, %v310
          %v312 = vrot.slane %v311, 2
          %v313 = vadd.f32 %v311, %v312
          %v314 = vrot.slane %v313, 1
          %v315 = vadd.f32 %v313, %v314
          %v316 = vsel %vm235, %v307, 0.0
          %v317 = vrot.slane %v316, 4
          %v318 = vadd.f32 %v316, %v317
          %v319 = vrot.slane %v318, 2
          %v320 = vadd.f32 %v318, %v319
          %v321 = vrot.slane %v320, 1
          %v322 = vadd.f32 %v320, %v321
          %v323 = vsel %vm235, %v308, 0.0
          %v324 = vrot.slane %v323, 4
          %v325 = vadd.f32 %v323, %v324
          %v326 = vrot.slane %v325, 2
          %v327 = vadd.f32 %v325, %v326
          %v328 = vrot.slane %v327, 1
          %v329 = vadd.f32 %v327, %v328
          %vm333 = vcmask 1041409
          %v334 = vsel %vm333, %v322, %v315
          %vm335 = vcmask 1042434
          %v336 = vsel %vm335, %v329, %v334
          %338 = vst [vmem:[%s219] sm:$0x7] %v336
        $region44: #{tpu_custom_call.1} parent=27 // pred_fallthru
          _
        %p339 = scmp.lt.s32.totalorder %s23, 1
        %s340 = scalar_select %p339, %s23, 1
        %s341 = smul.addr %s340, 4
        %s342 = scalar_lea.vmem %s2, %s341
        // Predicated region
        $region45: #{tpu_custom_call.1} parent=27 // pred_check
          %p343 = pneg %p105
        $region46: #{tpu_custom_call.1} parent=27 // pred_check_branch
          %345 = sbr.rel (%p343) target = $region48
        $region47: #{tpu_custom_call.1} parent=27 // pred_region
          _
        $region48: #{tpu_custom_call.1} parent=27 // pred_fallthru
          _
      $region28: #{tpu_custom_call.1} parent=5 // pred_fallthru
        _
      %p346 = scmp.le.s32.totalorder 2, %s14
      // Predicated region
      $region49: #{tpu_custom_call.1} parent=5 // pred_check
        %p347 = pneg %p346
      $region50: #{tpu_custom_call.1} parent=5 // pred_check_branch
        %349 = sbr.rel (%p347) target = $region52
      $region51: #{tpu_custom_call.1} parent=5 // pred_region
        %s350 = ssub.s32 %s14, 2
        // Predicated region
        $region53: #{tpu_custom_call.1} parent=51 // pred_check
          %p351 = pneg %p111
        $region54: #{tpu_custom_call.1} parent=51 // pred_check_branch
          %353 = sbr.rel (%p351) target = $region56
        $region55: #{tpu_custom_call.1} parent=51 // pred_region
          %p354 = scmp.lt.s32.totalorder %s25, 1
          %s355 = scalar_select %p354, %s25, 1
          %s356 = smul.addr %s355, 4
          %s357 = scalar_lea.vmem %s2, %s356
        $region56: #{tpu_custom_call.1} parent=51 // pred_fallthru
          _
      $region52: #{tpu_custom_call.1} parent=5 // pred_fallthru
        _
    $region6: #{tpu_custom_call.1} parent=1 // loop_footer
      %s18 = sadd.s32 1, %s14
    $region7: #{tpu_custom_call.1} parent=1 // loop_footer_branch
      %13 = sbr.rel target = $region3
    $region8: #{tpu_custom_call.1} parent=1 // loop_exit
      _
    %358 = vsyncpa [#allocation4], 1
    %s359 = scalar_lea.sflag [#allocation4], 1
    %360 = vsyncpa %s359, 1
    %361 = vsyncpa [#allocation6], 1
    %s362 = scalar_lea.sflag [#allocation6], 1
    %363 = vsyncpa %s362, 1

</llo_original>
